<compile_context>
chip_gen: v7x
topology: tpu7x:2x2x1
jax: 0.10.0
libtpu: 0.0.40
codegen_flags: <defaults>
</compile_context>

<pallas_src>
import functools

import jax
import jax.numpy as jnp
from jax.experimental import pallas as pl
from jax.experimental.pallas import tpu as pltpu

LANE = 128


def _round_up(x, m):
    return (x + m - 1) // m * m


def _pad_to(x, shape):
    pads = [(0, t - s) for s, t in zip(x.shape, shape)]
    return jnp.pad(x, pads)


def _tiles_for(n):
    """Pick (n_pad, tm, tk) so both tile dims divide n_pad.

    Tiles sized so bf16 A blocks + double-buffering stay far below the
    default scoped VMEM limit (16/32 MiB) and v7x's 64 MiB physical VMEM.
    """
    if n <= 256:
        n_pad = _round_up(n, 8)
        return n_pad, n_pad, n_pad
    tm, tk = 256, 512
    n_pad = _round_up(n, 512)  # lcm(tm, tk)
    return n_pad, tm, tk


# ---------------------------------------------------------------------------
# Kernel 1: row-tiled feature projection  P = X @ W   (small W fully resident)
# ---------------------------------------------------------------------------
def _project_kernel(x_ref, w_ref, o_ref):
    o_ref[...] = jnp.dot(
        x_ref[...], w_ref[...], preferred_element_type=jnp.float32
    ).astype(o_ref.dtype)


def _project(x, w, *, tm):
    n_pad, f_in = x.shape
    f_out = w.shape[1]
    return pl.pallas_call(
        _project_kernel,
        out_shape=jax.ShapeDtypeStruct((n_pad, f_out), jnp.bfloat16),
        grid_spec=pltpu.PrefetchScalarGridSpec(
            num_scalar_prefetch=0,
            grid=(n_pad // tm,),
            in_specs=[
                pl.BlockSpec((tm, f_in), lambda i: (i, 0)),
                pl.BlockSpec((f_in, f_out), lambda i: (0, 0)),
            ],
            out_specs=pl.BlockSpec((tm, f_out), lambda i: (i, 0)),
        ),
        compiler_params=pltpu.CompilerParams(
            dimension_semantics=("parallel",),
            vmem_limit_bytes=64 * 1024 * 1024,
        ),
        cost_estimate=pl.CostEstimate(
            flops=2 * n_pad * f_in * f_out,
            transcendentals=0,
            bytes_accessed=int(2 * (n_pad * f_in + f_in * f_out + n_pad * f_out)),
        ),
    )(x, w)


# ---------------------------------------------------------------------------
# Kernel 2: tiled aggregation  O = A_hat @ P + b  (+ optional ReLU)
#   grid = (row tiles [parallel], K tiles [arbitrary, last])
#   f32 accumulator resident in VMEM scratch across the K axis.
# ---------------------------------------------------------------------------
def _aggregate_kernel(a_ref, p_ref, b_ref, o_ref, acc_ref, *, apply_relu):
    k = pl.program_id(1)

    @pl.when(k == 0)
    def _():
        acc_ref[...] = jnp.zeros_like(acc_ref)

    acc_ref[...] += jnp.dot(
        a_ref[...], p_ref[...], preferred_element_type=jnp.float32
    )

    @pl.when(k == pl.num_programs(1) - 1)
    def _():
        out = acc_ref[...] + b_ref[...]        # bias + ReLU epilogue in f32
        if apply_relu:
            out = jnp.maximum(out, 0.0)
        o_ref[...] = out.astype(o_ref.dtype)   # downcast only at the store


def _aggregate(a_hat, p, bias, *, apply_relu, out_dtype, tm, tk):
    n_pad = a_hat.shape[0]
    f_out = p.shape[1]
    grid = (n_pad // tm, n_pad // tk)
    kernel = functools.partial(_aggregate_kernel, apply_relu=apply_relu)
    bytes_accessed = (
        a_hat.size * a_hat.dtype.itemsize
        + grid[0] * p.size * p.dtype.itemsize
        + n_pad * f_out * jnp.dtype(out_dtype).itemsize
    )
    return pl.pallas_call(
        kernel,
        out_shape=jax.ShapeDtypeStruct((n_pad, f_out), out_dtype),
        grid_spec=pltpu.PrefetchScalarGridSpec(
            num_scalar_prefetch=0,
            grid=grid,
            in_specs=[
                pl.BlockSpec((tm, tk), lambda i, k: (i, k)),
                pl.BlockSpec((tk, f_out), lambda i, k: (k, 0)),
                pl.BlockSpec((1, f_out), lambda i, k: (0, 0)),
            ],
            out_specs=pl.BlockSpec((tm, f_out), lambda i, k: (i, 0)),
            scratch_shapes=[pltpu.VMEM((tm, f_out), jnp.float32)],
        ),
        compiler_params=pltpu.CompilerParams(
            dimension_semantics=("parallel", "arbitrary"),
            vmem_limit_bytes=64 * 1024 * 1024,
        ),
        cost_estimate=pl.CostEstimate(
            flops=2 * n_pad * n_pad * f_out,
            transcendentals=0,
            bytes_accessed=int(bytes_accessed),
        ),
    )(a_hat, p, bias)


# ---------------------------------------------------------------------------
# Forward pass
# ---------------------------------------------------------------------------
@functools.partial(jax.jit, static_argnames=("num_nodes",))
def gcn_forward(x, edge_index, w1, b1, w2, b2, *, num_nodes):
    n = num_nodes
    f_in = x.shape[1]
    hidden = w1.shape[1]

    # ---- glue (plain JAX): dense A_hat = D^-1/2 (A + I) D^-1/2 ----
    # .set (not .add) dedups duplicate edges / stacked self-loops so the
    # normalization matches GCNConv's set-like treatment of edge_index.
    src = edge_index[0]
    dst = edge_index[1]
    loops = jnp.arange(n, dtype=edge_index.dtype)
    src = jnp.concatenate([src, loops])
    dst = jnp.concatenate([dst, loops])
    adj = jnp.zeros((n, n), jnp.float32).at[dst, src].set(1.0)
    deg = adj.sum(axis=1)
    dinv = jnp.where(deg > 0.0, jax.lax.rsqrt(deg), 0.0)
    a_hat = dinv[:, None] * adj * dinv[None, :]

    # ---- pad to lane-dense / tile-aligned shapes ----
    n_pad, tm, tk = _tiles_for(n)
    f_pad = _round_up(f_in, LANE)
    h_pad = _round_up(hidden, LANE)

    a_bf16 = _pad_to(a_hat, (n_pad, n_pad)).astype(jnp.bfloat16)
    x_bf16 = _pad_to(x, (n_pad, f_pad)).astype(jnp.bfloat16)
    w1_bf16 = _pad_to(w1, (f_pad, h_pad)).astype(jnp.bfloat16)
    w2_bf16 = _pad_to(w2, (h_pad, f_pad)).astype(jnp.bfloat16)
    b1_pad = _pad_to(b1, (1, h_pad)).astype(jnp.float32)
    b2_pad = _pad_to(b2, (1, f_pad)).astype(jnp.float32)

    # ---- layer 1: H = relu(A_hat @ (X @ W1) + b1) ----
    p1 = _project(x_bf16, w1_bf16, tm=tm)
    h = _aggregate(a_bf16, p1, b1_pad, apply_relu=True,
                   out_dtype=jnp.bfloat16, tm=tm, tk=tk)

    # Dropout: eval-mode identity (see TODO at top of file).

    # ---- layer 2: out = A_hat @ (H @ W2) + b2 ----
    p2 = _project(h, w2_bf16, tm=tm)
    out_pad = _aggregate(a_bf16, p2, b2_pad, apply_relu=False,
                         out_dtype=jnp.float32, tm=tm, tk=tk)

    return out_pad[:n, :f_in]


def init_params(key, num_node_features, hidden_channels):
    k1, k2 = jax.random.split(key, 2)
    # Glorot-uniform weights (PyG GCNConv default), zero biases.
    lim1 = jnp.sqrt(6.0 / (num_node_features + hidden_channels))
    w1 = jax.random.uniform(
        k1, (num_node_features, hidden_channels), jnp.float32, -lim1, lim1)
    b1 = jnp.zeros((1, hidden_channels), jnp.float32)
    lim2 = jnp.sqrt(6.0 / (hidden_channels + num_node_features))
    w2 = jax.random.uniform(
        k2, (hidden_channels, num_node_features), jnp.float32, -lim2, lim2)
    b2 = jnp.zeros((1, num_node_features), jnp.float32)
    return w1, b1, w2, b2


def _reference(x, edge_index, w1, b1, w2, b2, num_nodes):
    src, dst = edge_index[0], edge_index[1]
    loops = jnp.arange(num_nodes, dtype=edge_index.dtype)
    src = jnp.concatenate([src, loops])
    dst = jnp.concatenate([dst, loops])
    adj = jnp.zeros((num_nodes, num_nodes), jnp.float32).at[dst, src].set(1.0)
    deg = adj.sum(axis=1)
    dinv = jnp.where(deg > 0.0, jax.lax.rsqrt(deg), 0.0)
    a_hat = dinv[:, None] * adj * dinv[None, :]
    h = jnp.maximum(a_hat @ (x @ w1) + b1, 0.0)
    return a_hat @ (h @ w2) + b2


if __name__ == "__main__":
    num_nodes = 16
    num_node_features = 4
    hidden_channels = 32
    dropout = 0.5  # unused in eval-mode forward

    key = jax.random.PRNGKey(0)
    kx, ke, kp = jax.random.split(key, 3)

    # Node features [N, F]
    x = jax.random.normal(kx, (num_nodes, num_node_features), jnp.float32)

    # Random undirected edge list [2, E] (each edge stored both directions)
    num_base_edges = 24
    e = jax.random.randint(ke, (2, num_base_edges), 0, num_nodes, jnp.int32)
    edge_index = jnp.concatenate(
        [e, jnp.stack([e[1], e[0]])], axis=1)  # [2, 2*num_base_edges]

    w1, b1, w2, b2 = init_params(kp, num_node_features, hidden_channels)

    out = gcn_forward(x, edge_index, w1, b1, w2, b2, num_nodes=num_nodes)
    jax.block_until_ready(out)

    assert out.shape == (num_nodes, num_node_features)
    assert jnp.all(jnp.isfinite(out))

    ref = _reference(x, edge_index, w1, b1, w2, b2, num_nodes)
    assert jnp.allclose(out, ref, atol=1e-1, rtol=1e-1), (
        "mismatch vs f32 reference beyond bf16 tolerance")

    print("KERNEL_OK")
</pallas_src>

<mosaic_0001>
module attributes {stable_mosaic.version = 11 : i64} {
  func.func @_project_kernel(%arg0: i32, %arg1: memref<16x128xbf16, #tpu.memory_space<vmem>>, %arg2: memref<128x128xbf16, #tpu.memory_space<vmem>>, %arg3: memref<16x128xbf16, #tpu.memory_space<vmem>>) attributes {dimension_semantics = [#tpu.dimension_semantics<parallel>], iteration_bounds = array<i64: 1>, scalar_prefetch = 0 : i64, scratch_operands = 0 : i64, tpu.core_type = #tpu.core_type<tc>, window_params = [{transform_indices = @transform_0, window_bounds = array<i64: 16, 128>}, {pipeline_mode = #tpu.pipeline_mode<synchronous>, transform_indices = @transform_1, window_bounds = array<i64: 128, 128>}, {transform_indices = @transform_2, window_bounds = array<i64: 16, 128>}]} {
    %c0 = arith.constant 0 : index
    %c0_0 = arith.constant 0 : index
    %0 = vector.load %arg1[%c0, %c0_0] : memref<16x128xbf16, #tpu.memory_space<vmem>>, vector<16x128xbf16>
    %c0_1 = arith.constant 0 : index
    %c0_2 = arith.constant 0 : index
    %1 = vector.load %arg2[%c0_1, %c0_2] : memref<128x128xbf16, #tpu.memory_space<vmem>>, vector<128x128xbf16>
    %cst = arith.constant dense<0.000000e+00> : vector<16x128xf32>
    %2 = tpu.matmul %0, %1, %cst {dimension_numbers = #tpu.dot_dimension_numbers<[1], [0], [0], [1], [0, 0, 1, 1], [], []>} : vector<16x128xbf16>, vector<128x128xbf16>, vector<16x128xf32> -> vector<16x128xf32>
    %3 = arith.truncf %2 : vector<16x128xf32> to vector<16x128xbf16>
    %c0_3 = arith.constant 0 : index
    %c0_4 = arith.constant 0 : index
    %4 = vector.load %arg3[%c0_3, %c0_4] : memref<16x128xbf16, #tpu.memory_space<vmem>>, vector<16x128xbf16>
    tpu.vector_store %arg3[%c0_3, %c0_4], %3 {strides = array<i32>} : memref<16x128xbf16, #tpu.memory_space<vmem>>, vector<16x128xbf16>,
    return
  }
  func.func @transform_0(%arg0: i32) -> (i32, i32) {
    %c0_i32 = arith.constant 0 : i32
    %c0_i32_0 = arith.constant 0 : i32
    return %arg0, %c0_i32 : i32, i32
  }
  func.func @transform_1(%arg0: i32) -> (i32, i32) {
    %c0_i32 = arith.constant 0 : i32
    %c0_i32_0 = arith.constant 0 : i32
    %c0_i32_1 = arith.constant 0 : i32
    return %c0_i32, %c0_i32_0 : i32, i32
  }
  func.func @transform_2(%arg0: i32) -> (i32, i32) {
    %c0_i32 = arith.constant 0 : i32
    %c0_i32_0 = arith.constant 0 : i32
    return %arg0, %c0_i32 : i32, i32
  }
}

module attributes {stable_mosaic.version = 11 : i64} {
  func.func @_aggregate_kernel(%arg0: i32, %arg1: i32, %arg2: memref<16x16xbf16, #tpu.memory_space<vmem>>, %arg3: memref<16x128xbf16, #tpu.memory_space<vmem>>, %arg4: memref<1x128xf32, #tpu.memory_space<vmem>>, %arg5: memref<16x128xbf16, #tpu.memory_space<vmem>>, %arg6: memref<16x128xf32, #tpu.memory_space<vmem>>) attributes {dimension_semantics = [#tpu.dimension_semantics<parallel>, #tpu.dimension_semantics<arbitrary>], iteration_bounds = array<i64: 1, 1>, scalar_prefetch = 0 : i64, scratch_operands = 1 : i64, tpu.core_type = #tpu.core_type<tc>, window_params = [{transform_indices = @transform_0, window_bounds = array<i64: 16, 16>}, {transform_indices = @transform_1, window_bounds = array<i64: 16, 128>}, {pipeline_mode = #tpu.pipeline_mode<synchronous>, transform_indices = @transform_2, window_bounds = array<i64: 1, 128>}, {transform_indices = @transform_3, window_bounds = array<i64: 16, 128>}]} {
    %c0_i32 = arith.constant 0 : i32
    %0 = arith.cmpi eq, %arg1, %c0_i32 : i32
    %1 = arith.extui %0 : i1 to i32
    %c0_i32_0 = arith.constant 0 : i32
    %2 = arith.cmpi ne, %1, %c0_i32_0 : i32
    scf.if %2 {
      %cst_10 = arith.constant 0.000000e+00 : f32
      %12 = vector.broadcast %cst_10 : f32 to vector<16x128xf32>
      %c0_11 = arith.constant 0 : index
      %c0_12 = arith.constant 0 : index
      %13 = vector.load %arg6[%c0_11, %c0_12] : memref<16x128xf32, #tpu.memory_space<vmem>>, vector<16x128xf32>
      tpu.vector_store %arg6[%c0_11, %c0_12], %12 {strides = array<i32>} : memref<16x128xf32, #tpu.memory_space<vmem>>, vector<16x128xf32>,
    } else {
    }
    %c0 = arith.constant 0 : index
    %c0_1 = arith.constant 0 : index
    %3 = vector.load %arg6[%c0, %c0_1] : memref<16x128xf32, #tpu.memory_space<vmem>>, vector<16x128xf32>
    %c0_2 = arith.constant 0 : index
    %c0_3 = arith.constant 0 : index
    %4 = vector.load %arg2[%c0_2, %c0_3] : memref<16x16xbf16, #tpu.memory_space<vmem>>, vector<16x16xbf16>
    %c0_4 = arith.constant 0 : index
    %c0_5 = arith.constant 0 : index
    %5 = vector.load %arg3[%c0_4, %c0_5] : memref<16x128xbf16, #tpu.memory_space<vmem>>, vector<16x128xbf16>
    %cst = arith.constant dense<0.000000e+00> : vector<16x128xf32>
    %6 = tpu.matmul %4, %5, %cst {dimension_numbers = #tpu.dot_dimension_numbers<[1], [0], [0], [1], [0, 0, 1, 1], [], []>} : vector<16x16xbf16>, vector<16x128xbf16>, vector<16x128xf32> -> vector<16x128xf32>
    %7 = arith.addf %3, %6 : vector<16x128xf32>
    %c0_6 = arith.constant 0 : index
    %c0_7 = arith.constant 0 : index
    %8 = vector.load %arg6[%c0_6, %c0_7] : memref<16x128xf32, #tpu.memory_space<vmem>>, vector<16x128xf32>
    tpu.vector_store %arg6[%c0_6, %c0_7], %7 {strides = array<i32>} : memref<16x128xf32, #tpu.memory_space<vmem>>, vector<16x128xf32>,
    %c0_i32_8 = arith.constant 0 : i32
    %9 = arith.cmpi eq, %arg1, %c0_i32_8 : i32
    %10 = arith.extui %9 : i1 to i32
    %c0_i32_9 = arith.constant 0 : i32
    %11 = arith.cmpi ne, %10, %c0_i32_9 : i32
    scf.if %11 {
      %c0_10 = arith.constant 0 : index
      %c0_11 = arith.constant 0 : index
      %12 = vector.load %arg6[%c0_10, %c0_11] : memref<16x128xf32, #tpu.memory_space<vmem>>, vector<16x128xf32>
      %c0_12 = arith.constant 0 : index
      %c0_13 = arith.constant 0 : index
      %13 = vector.load %arg4[%c0_12, %c0_13] : memref<1x128xf32, #tpu.memory_space<vmem>>, vector<1x128xf32>
      %14 = vector.broadcast %13 : vector<1x128xf32> to vector<16x128xf32>
      %15 = arith.addf %12, %14 : vector<16x128xf32>
      %cst_14 = arith.constant 0.000000e+00 : f32
      %16 = vector.broadcast %cst_14 : f32 to vector<16x128xf32>
      %17 = arith.maximumf %15, %16 : vector<16x128xf32>
      %18 = arith.truncf %17 : vector<16x128xf32> to vector<16x128xbf16>
      %c0_15 = arith.constant 0 : index
      %c0_16 = arith.constant 0 : index
      %19 = vector.load %arg5[%c0_15, %c0_16] : memref<16x128xbf16, #tpu.memory_space<vmem>>, vector<16x128xbf16>
      tpu.vector_store %arg5[%c0_15, %c0_16], %18 {strides = array<i32>} : memref<16x128xbf16, #tpu.memory_space<vmem>>, vector<16x128xbf16>,
    } else {
    }
    return
  }
  func.func @transform_0(%arg0: i32, %arg1: i32) -> (i32, i32) {
    %c0_i32 = arith.constant 0 : i32
    return %arg0, %arg1 : i32, i32
  }
  func.func @transform_1(%arg0: i32, %arg1: i32) -> (i32, i32) {
    %c0_i32 = arith.constant 0 : i32
    %c0_i32_0 = arith.constant 0 : i32
    return %arg1, %c0_i32 : i32, i32
  }
  func.func @transform_2(%arg0: i32, %arg1: i32) -> (i32, i32) {
    %c0_i32 = arith.constant 0 : i32
    %c0_i32_0 = arith.constant 0 : i32
    %c0_i32_1 = arith.constant 0 : i32
    return %c0_i32, %c0_i32_0 : i32, i32
  }
  func.func @transform_3(%arg0: i32, %arg1: i32) -> (i32, i32) {
    %c0_i32 = arith.constant 0 : i32
    %c0_i32_0 = arith.constant 0 : i32
    return %arg0, %c0_i32 : i32, i32
  }
}

module attributes {stable_mosaic.version = 11 : i64} {
  func.func @_aggregate_kernel(%arg0: i32, %arg1: i32, %arg2: memref<16x16xbf16, #tpu.memory_space<vmem>>, %arg3: memref<16x128xbf16, #tpu.memory_space<vmem>>, %arg4: memref<1x128xf32, #tpu.memory_space<vmem>>, %arg5: memref<16x128xf32, #tpu.memory_space<vmem>>, %arg6: memref<16x128xf32, #tpu.memory_space<vmem>>) attributes {dimension_semantics = [#tpu.dimension_semantics<parallel>, #tpu.dimension_semantics<arbitrary>], iteration_bounds = array<i64: 1, 1>, scalar_prefetch = 0 : i64, scratch_operands = 1 : i64, tpu.core_type = #tpu.core_type<tc>, window_params = [{transform_indices = @transform_0, window_bounds = array<i64: 16, 16>}, {transform_indices = @transform_1, window_bounds = array<i64: 16, 128>}, {pipeline_mode = #tpu.pipeline_mode<synchronous>, transform_indices = @transform_2, window_bounds = array<i64: 1, 128>}, {transform_indices = @transform_3, window_bounds = array<i64: 16, 128>}]} {
    %c0_i32 = arith.constant 0 : i32
    %0 = arith.cmpi eq, %arg1, %c0_i32 : i32
    %1 = arith.extui %0 : i1 to i32
    %c0_i32_0 = arith.constant 0 : i32
    %2 = arith.cmpi ne, %1, %c0_i32_0 : i32
    scf.if %2 {
      %cst_10 = arith.constant 0.000000e+00 : f32
      %12 = vector.broadcast %cst_10 : f32 to vector<16x128xf32>
      %c0_11 = arith.constant 0 : index
      %c0_12 = arith.constant 0 : index
      %13 = vector.load %arg6[%c0_11, %c0_12] : memref<16x128xf32, #tpu.memory_space<vmem>>, vector<16x128xf32>
      tpu.vector_store %arg6[%c0_11, %c0_12], %12 {strides = array<i32>} : memref<16x128xf32, #tpu.memory_space<vmem>>, vector<16x128xf32>,
    } else {
    }
    %c0 = arith.constant 0 : index
    %c0_1 = arith.constant 0 : index
    %3 = vector.load %arg6[%c0, %c0_1] : memref<16x128xf32, #tpu.memory_space<vmem>>, vector<16x128xf32>
    %c0_2 = arith.constant 0 : index
    %c0_3 = arith.constant 0 : index
    %4 = vector.load %arg2[%c0_2, %c0_3] : memref<16x16xbf16, #tpu.memory_space<vmem>>, vector<16x16xbf16>
    %c0_4 = arith.constant 0 : index
    %c0_5 = arith.constant 0 : index
    %5 = vector.load %arg3[%c0_4, %c0_5] : memref<16x128xbf16, #tpu.memory_space<vmem>>, vector<16x128xbf16>
    %cst = arith.constant dense<0.000000e+00> : vector<16x128xf32>
    %6 = tpu.matmul %4, %5, %cst {dimension_numbers = #tpu.dot_dimension_numbers<[1], [0], [0], [1], [0, 0, 1, 1], [], []>} : vector<16x16xbf16>, vector<16x128xbf16>, vector<16x128xf32> -> vector<16x128xf32>
    %7 = arith.addf %3, %6 : vector<16x128xf32>
    %c0_6 = arith.constant 0 : index
    %c0_7 = arith.constant 0 : index
    %8 = vector.load %arg6[%c0_6, %c0_7] : memref<16x128xf32, #tpu.memory_space<vmem>>, vector<16x128xf32>
    tpu.vector_store %arg6[%c0_6, %c0_7], %7 {strides = array<i32>} : memref<16x128xf32, #tpu.memory_space<vmem>>, vector<16x128xf32>,
    %c0_i32_8 = arith.constant 0 : i32
    %9 = arith.cmpi eq, %arg1, %c0_i32_8 : i32
    %10 = arith.extui %9 : i1 to i32
    %c0_i32_9 = arith.constant 0 : i32
    %11 = arith.cmpi ne, %10, %c0_i32_9 : i32
    scf.if %11 {
      %c0_10 = arith.constant 0 : index
      %c0_11 = arith.constant 0 : index
      %12 = vector.load %arg6[%c0_10, %c0_11] : memref<16x128xf32, #tpu.memory_space<vmem>>, vector<16x128xf32>
      %c0_12 = arith.constant 0 : index
      %c0_13 = arith.constant 0 : index
      %13 = vector.load %arg4[%c0_12, %c0_13] : memref<1x128xf32, #tpu.memory_space<vmem>>, vector<1x128xf32>
      %14 = vector.broadcast %13 : vector<1x128xf32> to vector<16x128xf32>
      %15 = arith.addf %12, %14 : vector<16x128xf32>
      %c0_14 = arith.constant 0 : index
      %c0_15 = arith.constant 0 : index
      %16 = vector.load %arg5[%c0_14, %c0_15] : memref<16x128xf32, #tpu.memory_space<vmem>>, vector<16x128xf32>
      tpu.vector_store %arg5[%c0_14, %c0_15], %15 {strides = array<i32>} : memref<16x128xf32, #tpu.memory_space<vmem>>, vector<16x128xf32>,
    } else {
    }
    return
  }
  func.func @transform_0(%arg0: i32, %arg1: i32) -> (i32, i32) {
    %c0_i32 = arith.constant 0 : i32
    return %arg0, %arg1 : i32, i32
  }
  func.func @transform_1(%arg0: i32, %arg1: i32) -> (i32, i32) {
    %c0_i32 = arith.constant 0 : i32
    %c0_i32_0 = arith.constant 0 : i32
    return %arg1, %c0_i32 : i32, i32
  }
  func.func @transform_2(%arg0: i32, %arg1: i32) -> (i32, i32) {
    %c0_i32 = arith.constant 0 : i32
    %c0_i32_0 = arith.constant 0 : i32
    %c0_i32_1 = arith.constant 0 : i32
    return %c0_i32, %c0_i32_0 : i32, i32
  }
  func.func @transform_3(%arg0: i32, %arg1: i32) -> (i32, i32) {
    %c0_i32 = arith.constant 0 : i32
    %c0_i32_0 = arith.constant 0 : i32
    return %arg0, %c0_i32 : i32, i32
  }
}

</mosaic_0001>

<llo_original>
// kernel: gcn_forward.4
$region0: #{gcn_forward.4}
  #allocation0 [shape = 'u32[]', space=smem, size = 0x4, offset = 0x4, fixed_abs, tag = 'smem constant byte address 0x4 - core index']
  #allocation1 [shape = 'u32[144,128]{1,0:T(1,128)}', space=vmem, size = 0x12000, scoped, tag = 'internal scratch']
  %s0 = inlined_call_operand.hbm [shape: bf16[16,128], index: 0, kind: input, shape index: {}]
  %s1 = inlined_call_operand.hbm [shape: bf16[128,128], index: 1, kind: input, shape index: {}]
  %s2 = inlined_call_operand.hbm [shape: bf16[16,128], index: 2, kind: output, shape index: {}]
  %s3 = sld [smem:[#allocation0]]
  $region26: #{gcn_forward.4} parent=0
    _
  %s5 = ssub.s32 1, %s3
  %s6 = scalar_select 0, %s5, %s3
  $region1: #{gcn_forward.4} parent=0
    #allocation2 [shape = 'u8[4096]{0}', space=vmem, size = 0x1000, scoped, tag = 'input window, operand 0, single buffered']
    #allocation3 [shape = 's32[1]{0}', space=sflag, size = 0x4, scoped, tag = 'scoped memory for gcn_forward.4']
    #allocation4 [shape = 's32[1]{0}', space=sflag, size = 0x4, scoped, tag = 'scoped memory for gcn_forward.4']
    #allocation5 [shape = 'u8[32768]{0}', space=vmem, size = 0x8000, scoped, tag = 'input window, operand 1, single buffered']
    #allocation6 [shape = 's32[1]{0}', space=sflag, size = 0x4, scoped, tag = 'scoped memory for gcn_forward.4']
    #allocation7 [shape = 'u8[4096]{0}', space=vmem, size = 0x1000, scoped, tag = 'output window, operand 0, single buffered']
    %7 = vsyncpa [#allocation3], 0
    %8 = vsyncpa [#allocation6], 0
    %9 = vsyncpa [#allocation4], 0
    // Predicated region
    $region2: #{gcn_forward.4} parent=1 // pred_check
      _
    $region3: #{gcn_forward.4} parent=1 // pred_check_branch
      %11 = sbr.rel (0) target = $region5
    $region4: #{gcn_forward.4} parent=1 // pred_region
      %s13 = ssub.s32 128, 128
      %14 = vsyncadd [#allocation3], %s13
      %s15 = sshll.u32 [#allocation2], 4
      %s16 = int_to_ptr.vmem [resolvable:$true] %s15
      %21 = dma.hbm_to_vmem [thread:$0]  %s0, 128, %s16, [#allocation3], 64, 64, 4
    $region5: #{gcn_forward.4} parent=1 // pred_fallthru
      _
    // Predicated region
    $region6: #{gcn_forward.4} parent=1 // pred_check
      _
    $region7: #{gcn_forward.4} parent=1 // pred_check_branch
      %23 = sbr.rel (0) target = $region9
    $region8: #{gcn_forward.4} parent=1 // pred_region
      %s25 = ssub.s32 1024, 1024
      %26 = vsyncadd [#allocation6], %s25
      %s27 = sshll.u32 [#allocation5], 4
      %s28 = int_to_ptr.vmem [resolvable:$true] %s27
      %33 = dma.hbm_to_vmem [thread:$0]  %s1, 1024, %s28, [#allocation6], 64, 64, 4
    $region9: #{gcn_forward.4} parent=1 // pred_fallthru
      _
    // Predicated region
    $region10: #{gcn_forward.4} parent=1 // pred_check
      _
    $region11: #{gcn_forward.4} parent=1 // pred_check_branch
      %35 = sbr.rel (0) target = $region13
    $region12: #{gcn_forward.4} parent=1 // pred_region
      %36 = dma.done [#allocation3], 128
    $region13: #{gcn_forward.4} parent=1 // pred_fallthru
      _
    // Predicated region
    $region14: #{gcn_forward.4} parent=1 // pred_check
      _
    $region15: #{gcn_forward.4} parent=1 // pred_check_branch
      %38 = sbr.rel (0) target = $region17
    $region16: #{gcn_forward.4} parent=1 // pred_region
      %39 = dma.done [#allocation6], 1024
    $region17: #{gcn_forward.4} parent=1 // pred_fallthru
      _
    %v41 = vld [vmem:[#allocation2] sm:$0xf]
    %v42 = vld [vmem:[#allocation2 + $0x4] sm:$0xf]
    %v43 = vld [vmem:[#allocation5] sm:$0xf]
    %v44 = vld [vmem:[#allocation5 + $0x4] sm:$0xf]
    %v45 = vld [vmem:[#allocation5 + $0x8] sm:$0xf]
    %v46 = vld [vmem:[#allocation5 + $0xc] sm:$0xf]
    %v47 = vld [vmem:[#allocation5 + $0x10] sm:$0xf]
    %v48 = vld [vmem:[#allocation5 + $0x14] sm:$0xf]
    %v49 = vld [vmem:[#allocation5 + $0x18] sm:$0xf]
    %v50 = vld [vmem:[#allocation5 + $0x1c] sm:$0xf]
    %v51 = vld [vmem:[#allocation5 + $0x20] sm:$0xf]
    %v52 = vld [vmem:[#allocation5 + $0x24] sm:$0xf]
    %v53 = vld [vmem:[#allocation5 + $0x28] sm:$0xf]
    %v54 = vld [vmem:[#allocation5 + $0x2c] sm:$0xf]
    %v55 = vld [vmem:[#allocation5 + $0x30] sm:$0xf]
    %v56 = vld [vmem:[#allocation5 + $0x34] sm:$0xf]
    %v57 = vld [vmem:[#allocation5 + $0x38] sm:$0xf]
    %v58 = vld [vmem:[#allocation5 + $0x3c] sm:$0xf]
    %v61 = vunpack.c.l.b16 %v41
    %v62 = vunpack.c.l.b16 %v42
    %v63 = vpack.c.b16 %v62, %v61
    %v81 = vunpack.c.l.b16 %v43
    %v82 = vunpack.c.l.b16 %v44
    %v83 = vunpack.c.l.b16 %v45
    %v84 = vunpack.c.l.b16 %v46
    %v85 = vunpack.c.l.b16 %v47
    %v86 = vunpack.c.l.b16 %v48
    %v87 = vunpack.c.l.b16 %v49
    %v88 = vunpack.c.l.b16 %v50
    %v89 = vunpack.c.l.b16 %v51
    %v90 = vunpack.c.l.b16 %v52
    %v91 = vunpack.c.l.b16 %v53
    %v92 = vunpack.c.l.b16 %v54
    %v93 = vunpack.c.l.b16 %v55
    %v94 = vunpack.c.l.b16 %v56
    %v95 = vunpack.c.l.b16 %v57
    %v96 = vunpack.c.l.b16 %v58
    %v97 = vpack.c.b16 %v82, %v81
    %v98 = vpack.c.b16 %v84, %v83
    %v99 = vpack.c.b16 %v86, %v85
    %v100 = vpack.c.b16 %v88, %v87
    %v101 = vpack.c.b16 %v90, %v89
    %v102 = vpack.c.b16 %v92, %v91
    %v103 = vpack.c.b16 %v94, %v93
    %v104 = vpack.c.b16 %v96, %v95
    %113 = vmatprep.subr.bf16.mxu0 0
    %114 = vmatpush1.bf16.msra.mxu0 %v97
    %115 = vmatprep.subr.bf16.mxu0 0
    %116 = vmatpush1.bf16.msra.mxu0 %v98
    %117 = vmatprep.subr.bf16.mxu0 0
    %118 = vmatpush1.bf16.msra.mxu0 %v99
    %119 = vmatprep.subr.bf16.mxu0 0
    %120 = vmatpush1.bf16.msra.mxu0 %v100
    %121 = vmatprep.subr.bf16.mxu0 0
    %122 = vmatpush1.bf16.msra.mxu0 %v101
    %123 = vmatprep.subr.bf16.mxu0 0
    %124 = vmatpush1.bf16.msra.mxu0 %v102
    %125 = vmatprep.subr.bf16.mxu0 0
    %126 = vmatpush1.bf16.msra.mxu0 %v103
    %127 = vmatprep.subr.bf16.mxu0 0
    %128 = vmatpush1.bf16.msra.mxu0 %v104
    %129 = vmatprep.subr.bf16.mxu0 0
    %130 = vmatpush1.bf16.msra.mxu0 0
    %131 = vmatprep.subr.bf16.mxu0 0
    %132 = vmatpush1.bf16.msra.mxu0 0
    %133 = vmatprep.subr.bf16.mxu0 0
    %134 = vmatpush1.bf16.msra.mxu0 0
    %135 = vmatprep.subr.bf16.mxu0 0
    %136 = vmatpush1.bf16.msra.mxu0 0
    %137 = vmatprep.subr.bf16.mxu0 0
    %138 = vmatpush1.bf16.msra.mxu0 0
    %139 = vmatprep.subr.bf16.mxu0 0
    %140 = vmatpush1.bf16.msra.mxu0 0
    %141 = vmatprep.subr.bf16.mxu0 0
    %142 = vmatpush1.bf16.msra.mxu0 0
    %143 = vmatprep.subr.bf16.mxu0 0
    %144 = vmatpush1.bf16.msra.mxu0 0
    %145 = vmatprep.mubr.bf16.mxu0 0
    %146 = vmatmul.mubr.bf16.gmra.mrb[0].mxu0 %v63
    %v147 = vpop.f32.mrb[0].mxu0
    %v148 = vadd.f32 0.0, %v147
    %v149 = vpop.f32.mrb[0].mxu0
    %v150 = vpop.f32.mrb[0].mxu0
    %v151 = vadd.f32 0.0, %v150
    %v152 = vpop.f32.mrb[0].mxu0
    %153 = vdwg.mxu0
    %v154 = vpack.c.bf16 %v151, %v148
    %v156 = vunpack.c.l.b16 %v154
    %v157 = vunpack.c.h.b16 %v154
    %v158 = vpack.c.b16 %v156, %v156
    %v159 = vpack.c.b16 %v157, %v157
    %162 = vst [vmem:[#allocation7] sm:$0xf] %v158
    %163 = vst [vmem:[#allocation7 + $0x4] sm:$0xf] %v159
    // Predicated region
    $region18: #{gcn_forward.4} parent=1 // pred_check
      _
    $region19: #{gcn_forward.4} parent=1 // pred_check_branch
      %165 = sbr.rel (0) target = $region21
    $region20: #{gcn_forward.4} parent=1 // pred_region
      %s167 = ssub.s32 128, 128
      %168 = vsyncadd [#allocation4], %s167
      %s169 = sshll.u32 [#allocation7], 4
      %s170 = int_to_ptr.vmem [resolvable:$true] %s169
      %175 = dma.vmem_to_hbm [thread:$0]  %s170, 128, %s2, [#allocation4], 64, 64, 4
    $region21: #{gcn_forward.4} parent=1 // pred_fallthru
      _
    // Predicated region
    $region22: #{gcn_forward.4} parent=1 // pred_check
      _
    $region23: #{gcn_forward.4} parent=1 // pred_check_branch
      %177 = sbr.rel (0) target = $region25
    $region24: #{gcn_forward.4} parent=1 // pred_region
      %178 = dma.done [#allocation4], 128
    $region25: #{gcn_forward.4} parent=1 // pred_fallthru
      _
    %179 = vsyncpa [#allocation3], 1
    %180 = vsyncpa [#allocation6], 1
    %181 = vsyncpa [#allocation4], 1

// kernel: gcn_forward.7
$region0: #{gcn_forward.7}
  #allocation0 [shape = 'u32[]', space=smem, size = 0x4, offset = 0x4, fixed_abs, tag = 'smem constant byte address 0x4 - core index']
  #allocation1 [shape = 'u32[144,128]{1,0:T(1,128)}', space=vmem, size = 0x12000, scoped, tag = 'internal scratch']
  #allocation2 [shape = 'f32[16,128]{1,0:T(8,128)}', space=vmem, size = 0x2000, scoped, tag = 'scratch operand']
  %s0 = inlined_call_operand.hbm [shape: bf16[16,16], index: 0, kind: input, shape index: {}]
  %s1 = inlined_call_operand.hbm [shape: bf16[16,128], index: 1, kind: input, shape index: {}]
  %s2 = inlined_call_operand.hbm [shape: f32[1,128], index: 2, kind: input, shape index: {}]
  %s3 = inlined_call_operand.hbm [shape: f32[16,128], index: 3, kind: output, shape index: {}]
  %s4 = sld [smem:[#allocation0]]
  $region42: #{gcn_forward.7} parent=0
    _
  %s6 = ssub.s32 1, %s4
  %s7 = scalar_select 0, %s6, %s4
  $region1: #{gcn_forward.7} parent=0
    #allocation3 [shape = 'u8[4096]{0}', space=vmem, size = 0x1000, scoped, tag = 'input window, operand 0, single buffered']
    #allocation4 [shape = 's32[1]{0}', space=sflag, size = 0x4, scoped, tag = 'scoped memory for gcn_forward.7']
    #allocation5 [shape = 's32[1]{0}', space=sflag, size = 0x4, scoped, tag = 'scoped memory for gcn_forward.7']
    #allocation6 [shape = 'u8[4096]{0}', space=vmem, size = 0x1000, scoped, tag = 'input window, operand 1, single buffered']
    #allocation7 [shape = 's32[1]{0}', space=sflag, size = 0x4, scoped, tag = 'scoped memory for gcn_forward.7']
    #allocation8 [shape = 'u8[512]{0}', space=vmem, size = 0x400, scoped, tag = 'input window, operand 2, single buffered']
    #allocation9 [shape = 'u8[8192]{0}', space=vmem, size = 0x2000, scoped, tag = 'output window, operand 0, single buffered']
    %8 = vsyncpa [#allocation4], 0
    %9 = vsyncpa [#allocation7], 0
    %10 = vsyncpa [#allocation5], 0
    // Predicated region
    $region2: #{gcn_forward.7} parent=1 // pred_check
      _
    $region3: #{gcn_forward.7} parent=1 // pred_check_branch
      %12 = sbr.rel (0) target = $region5
    $region4: #{gcn_forward.7} parent=1 // pred_region
      %s14 = ssub.s32 128, 128
      %15 = vsyncadd [#allocation4], %s14
      %s16 = sshll.u32 [#allocation3], 4
      %s17 = int_to_ptr.vmem [resolvable:$true] %s16
      %22 = dma.hbm_to_vmem [thread:$0]  %s0, 128, %s17, [#allocation4], 64, 64, 4
    $region5: #{gcn_forward.7} parent=1 // pred_fallthru
      _
    // Predicated region
    $region6: #{gcn_forward.7} parent=1 // pred_check
      _
    $region7: #{gcn_forward.7} parent=1 // pred_check_branch
      %24 = sbr.rel (0) target = $region9
    $region8: #{gcn_forward.7} parent=1 // pred_region
      %s26 = ssub.s32 128, 128
      %27 = vsyncadd [#allocation7], %s26
      %s28 = sshll.u32 [#allocation6], 4
      %s29 = int_to_ptr.vmem [resolvable:$true] %s28
      %34 = dma.hbm_to_vmem [thread:$0]  %s1, 128, %s29, [#allocation7], 64, 64, 4
    $region9: #{gcn_forward.7} parent=1 // pred_fallthru
      _
    // Predicated region
    $region10: #{gcn_forward.7} parent=1 // pred_check
      _
    $region11: #{gcn_forward.7} parent=1 // pred_check_branch
      %36 = sbr.rel (0) target = $region13
    $region12: #{gcn_forward.7} parent=1 // pred_region
      %s38 = ssub.s32 16, 16
      %39 = vsyncadd [#allocation7], %s38
      %s41 = sshll.u32 [#allocation8], 4
      %s42 = int_to_ptr.vmem [resolvable:$true] %s41
      %44 = dma.hbm_to_vmem [thread:$0]  %s2, 16, %s42, [#allocation7]
    $region13: #{gcn_forward.7} parent=1 // pred_fallthru
      _
    // Predicated region
    $region14: #{gcn_forward.7} parent=1 // pred_check
      _
    $region15: #{gcn_forward.7} parent=1 // pred_check_branch
      %46 = sbr.rel (0) target = $region17
    $region16: #{gcn_forward.7} parent=1 // pred_region
      %47 = dma.done [#allocation4], 128
    $region17: #{gcn_forward.7} parent=1 // pred_fallthru
      _
    // Predicated region
    $region18: #{gcn_forward.7} parent=1 // pred_check
      _
    $region19: #{gcn_forward.7} parent=1 // pred_check_branch
      %49 = sbr.rel (0) target = $region21
    $region20: #{gcn_forward.7} parent=1 // pred_region
      %50 = dma.done [#allocation7], 128
    $region21: #{gcn_forward.7} parent=1 // pred_fallthru
      _
    // Predicated region
    $region22: #{gcn_forward.7} parent=1 // pred_check
      _
    $region23: #{gcn_forward.7} parent=1 // pred_check_branch
      %52 = sbr.rel (0) target = $region25
    $region24: #{gcn_forward.7} parent=1 // pred_region
      %53 = dma.done [#allocation7], 16
    $region25: #{gcn_forward.7} parent=1 // pred_fallthru
      _
    %p55 = scmp.eq.s32.totalorder 0, 0
    // Predicated region
    $region26: #{gcn_forward.7} parent=1 // pred_check
      %p56 = pneg %p55
    $region27: #{gcn_forward.7} parent=1 // pred_check_branch
      %58 = sbr.rel (%p56) target = $region29
    $region28: #{gcn_forward.7} parent=1 // pred_region
      %59 = vst [vmem:[#allocation2] sm:$0xff] 0.0
      %60 = vst [vmem:[#allocation2 + $0x8] sm:$0xff] 0.0
    $region29: #{gcn_forward.7} parent=1 // pred_fallthru
      _
    %v61 = vld [vmem:[#allocation2] sm:$0xff]
    %v62 = vld [vmem:[#allocation2 + $0x8] sm:$0xff]
    %v63 = vld [vmem:[#allocation3] sm:$0xf]
    %v64 = vld [vmem:[#allocation3 + $0x4] sm:$0xf]
    %v65 = vld [vmem:[#allocation6] sm:$0xf]
    %v66 = vld [vmem:[#allocation6 + $0x4] sm:$0xf]
    %v69 = vunpack.c.l.b16 %v63
    %v70 = vunpack.c.l.b16 %v64
    %v71 = vpack.c.b16 %v70, %v69
    %v74 = vunpack.c.l.b16 %v65
    %v75 = vunpack.c.l.b16 %v66
    %v76 = vpack.c.b16 %v75, %v74
    %vm78 = vcmask 130048
    %v80 = vsel %vm78, %v71, 0
    %82 = vmatprep.subr.bf16.mxu0 0
    %83 = vmatpush1.bf16.msra.mxu0 %v76
    %84 = vmatprep.subr.bf16.mxu0 0
    %85 = vmatpush1.bf16.msra.mxu0 0
    %86 = vmatprep.subr.bf16.mxu0 0
    %87 = vmatpush1.bf16.msra.mxu0 0
    %88 = vmatprep.subr.bf16.mxu0 0
    %89 = vmatpush1.bf16.msra.mxu0 0
    %90 = vmatprep.subr.bf16.mxu0 0
    %91 = vmatpush1.bf16.msra.mxu0 0
    %92 = vmatprep.subr.bf16.mxu0 0
    %93 = vmatpush1.bf16.msra.mxu0 0
    %94 = vmatprep.subr.bf16.mxu0 0
    %95 = vmatpush1.bf16.msra.mxu0 0
    %96 = vmatprep.subr.bf16.mxu0 0
    %97 = vmatpush1.bf16.msra.mxu0 0
    %98 = vmatprep.subr.bf16.mxu0 0
    %99 = vmatpush1.bf16.msra.mxu0 0
    %100 = vmatprep.subr.bf16.mxu0 0
    %101 = vmatpush1.bf16.msra.mxu0 0
    %102 = vmatprep.subr.bf16.mxu0 0
    %103 = vmatpush1.bf16.msra.mxu0 0
    %104 = vmatprep.subr.bf16.mxu0 0
    %105 = vmatpush1.bf16.msra.mxu0 0
    %106 = vmatprep.subr.bf16.mxu0 0
    %107 = vmatpush1.bf16.msra.mxu0 0
    %108 = vmatprep.subr.bf16.mxu0 0
    %109 = vmatpush1.bf16.msra.mxu0 0
    %110 = vmatprep.subr.bf16.mxu0 0
    %111 = vmatpush1.bf16.msra.mxu0 0
    %112 = vmatprep.subr.bf16.mxu0 0
    %113 = vmatpush1.bf16.msra.mxu0 0
    %114 = vmatprep.mubr.bf16.mxu0 0
    %115 = vmatmul.mubr.bf16.gmra.mrb[0].mxu0 %v80
    %v116 = vpop.f32.mrb[0].mxu0
    %v117 = vadd.f32 0.0, %v116
    %v118 = vpop.f32.mrb[0].mxu0
    %v119 = vpop.f32.mrb[0].mxu0
    %v120 = vadd.f32 0.0, %v119
    %v121 = vpop.f32.mrb[0].mxu0
    %122 = vdwg.mxu0
    %v123 = vadd.f32 %v61, %v117
    %v124 = vadd.f32 %v62, %v120
    %125 = vst [vmem:[#allocation2] sm:$0xff] %v123
    %126 = vst [vmem:[#allocation2 + $0x8] sm:$0xff] %v124
    // Predicated region
    $region30: #{gcn_forward.7} parent=1 // pred_check
      %p127 = pneg %p55
    $region31: #{gcn_forward.7} parent=1 // pred_check_branch
      %129 = sbr.rel (%p127) target = $region33
    $region32: #{gcn_forward.7} parent=1 // pred_region
      %v130 = vld [vmem:[#allocation2] sm:$0xff]
      %v131 = vld [vmem:[#allocation2 + $0x8] sm:$0xff]
      %v132 = vld [vmem:[#allocation8] sm:$0x1]
      %v134 = vlaneseq
      %v135 = vshrl.u32 %v134, 7
      %v136 = vsub.s32 0, %v135
      %v137 = vrot.slane %v132, %v136
      %v139 = vadd.f32 %v130, %v137
      %v140 = vadd.f32 %v131, %v137
      %141 = vst [vmem:[#allocation9] sm:$0xff] %v139
      %142 = vst [vmem:[#allocation9 + $0x8] sm:$0xff] %v140
    $region33: #{gcn_forward.7} parent=1 // pred_fallthru
      _
    // Predicated region
    $region34: #{gcn_forward.7} parent=1 // pred_check
      _
    $region35: #{gcn_forward.7} parent=1 // pred_check_branch
      %144 = sbr.rel (0) target = $region37
    $region36: #{gcn_forward.7} parent=1 // pred_region
      %s146 = ssub.s32 256, 256
      %147 = vsyncadd [#allocation5], %s146
      %s148 = sshll.u32 [#allocation9], 4
      %s149 = int_to_ptr.vmem [resolvable:$true] %s148
      %154 = dma.vmem_to_hbm [thread:$0]  %s149, 256, %s3, [#allocation5], 128, 128, 8
    $region37: #{gcn_forward.7} parent=1 // pred_fallthru
      _
    // Predicated region
    $region38: #{gcn_forward.7} parent=1 // pred_check
      _
    $region39: #{gcn_forward.7} parent=1 // pred_check_branch
      %156 = sbr.rel (0) target = $region41
    $region40: #{gcn_forward.7} parent=1 // pred_region
      %157 = dma.done [#allocation5], 256
    $region41: #{gcn_forward.7} parent=1 // pred_fallthru
      _
    %158 = vsyncpa [#allocation4], 1
    %159 = vsyncpa [#allocation7], 1
    %160 = vsyncpa [#allocation5], 1

// kernel: gcn_forward.5
$region0: #{gcn_forward.5}
  #allocation0 [shape = 'u32[]', space=smem, size = 0x4, offset = 0x4, fixed_abs, tag = 'smem constant byte address 0x4 - core index']
  #allocation1 [shape = 'u32[144,128]{1,0:T(1,128)}', space=vmem, size = 0x12000, scoped, tag = 'internal scratch']
  #allocation2 [shape = 'f32[16,128]{1,0:T(8,128)}', space=vmem, size = 0x2000, scoped, tag = 'scratch operand']
  %s0 = inlined_call_operand.hbm [shape: bf16[16,16], index: 0, kind: input, shape index: {}]
  %s1 = inlined_call_operand.hbm [shape: bf16[16,128], index: 1, kind: input, shape index: {}]
  %s2 = inlined_call_operand.hbm [shape: f32[1,128], index: 2, kind: input, shape index: {}]
  %s3 = inlined_call_operand.hbm [shape: bf16[16,128], index: 3, kind: output, shape index: {}]
  %s4 = sld [smem:[#allocation0]]
  $region42: #{gcn_forward.5} parent=0
    _
  %s6 = ssub.s32 1, %s4
  %s7 = scalar_select 0, %s6, %s4
  $region1: #{gcn_forward.5} parent=0
    #allocation3 [shape = 'u8[4096]{0}', space=vmem, size = 0x1000, scoped, tag = 'input window, operand 0, single buffered']
    #allocation4 [shape = 's32[1]{0}', space=sflag, size = 0x4, scoped, tag = 'scoped memory for gcn_forward.5']
    #allocation5 [shape = 's32[1]{0}', space=sflag, size = 0x4, scoped, tag = 'scoped memory for gcn_forward.5']
    #allocation6 [shape = 'u8[4096]{0}', space=vmem, size = 0x1000, scoped, tag = 'input window, operand 1, single buffered']
    #allocation7 [shape = 's32[1]{0}', space=sflag, size = 0x4, scoped, tag = 'scoped memory for gcn_forward.5']
    #allocation8 [shape = 'u8[512]{0}', space=vmem, size = 0x400, scoped, tag = 'input window, operand 2, single buffered']
    #allocation9 [shape = 'u8[4096]{0}', space=vmem, size = 0x1000, scoped, tag = 'output window, operand 0, single buffered']
    %8 = vsyncpa [#allocation4], 0
    %9 = vsyncpa [#allocation7], 0
    %10 = vsyncpa [#allocation5], 0
    // Predicated region
    $region2: #{gcn_forward.5} parent=1 // pred_check
      _
    $region3: #{gcn_forward.5} parent=1 // pred_check_branch
      %12 = sbr.rel (0) target = $region5
    $region4: #{gcn_forward.5} parent=1 // pred_region
      %s14 = ssub.s32 128, 128
      %15 = vsyncadd [#allocation4], %s14
      %s16 = sshll.u32 [#allocation3], 4
      %s17 = int_to_ptr.vmem [resolvable:$true] %s16
      %22 = dma.hbm_to_vmem [thread:$0]  %s0, 128, %s17, [#allocation4], 64, 64, 4
    $region5: #{gcn_forward.5} parent=1 // pred_fallthru
      _
    // Predicated region
    $region6: #{gcn_forward.5} parent=1 // pred_check
      _
    $region7: #{gcn_forward.5} parent=1 // pred_check_branch
      %24 = sbr.rel (0) target = $region9
    $region8: #{gcn_forward.5} parent=1 // pred_region
      %s26 = ssub.s32 128, 128
      %27 = vsyncadd [#allocation7], %s26
      %s28 = sshll.u32 [#allocation6], 4
      %s29 = int_to_ptr.vmem [resolvable:$true] %s28
      %34 = dma.hbm_to_vmem [thread:$0]  %s1, 128, %s29, [#allocation7], 64, 64, 4
    $region9: #{gcn_forward.5} parent=1 // pred_fallthru
      _
    // Predicated region
    $region10: #{gcn_forward.5} parent=1 // pred_check
      _
    $region11: #{gcn_forward.5} parent=1 // pred_check_branch
      %36 = sbr.rel (0) target = $region13
    $region12: #{gcn_forward.5} parent=1 // pred_region
      %s38 = ssub.s32 16, 16
      %39 = vsyncadd [#allocation7], %s38
      %s41 = sshll.u32 [#allocation8], 4
      %s42 = int_to_ptr.vmem [resolvable:$true] %s41
      %44 = dma.hbm_to_vmem [thread:$0]  %s2, 16, %s42, [#allocation7]
    $region13: #{gcn_forward.5} parent=1 // pred_fallthru
      _
    // Predicated region
    $region14: #{gcn_forward.5} parent=1 // pred_check
      _
    $region15: #{gcn_forward.5} parent=1 // pred_check_branch
      %46 = sbr.rel (0) target = $region17
    $region16: #{gcn_forward.5} parent=1 // pred_region
      %47 = dma.done [#allocation4], 128
    $region17: #{gcn_forward.5} parent=1 // pred_fallthru
      _
    // Predicated region
    $region18: #{gcn_forward.5} parent=1 // pred_check
      _
    $region19: #{gcn_forward.5} parent=1 // pred_check_branch
      %49 = sbr.rel (0) target = $region21
    $region20: #{gcn_forward.5} parent=1 // pred_region
      %50 = dma.done [#allocation7], 128
    $region21: #{gcn_forward.5} parent=1 // pred_fallthru
      _
    // Predicated region
    $region22: #{gcn_forward.5} parent=1 // pred_check
      _
    $region23: #{gcn_forward.5} parent=1 // pred_check_branch
      %52 = sbr.rel (0) target = $region25
    $region24: #{gcn_forward.5} parent=1 // pred_region
      %53 = dma.done [#allocation7], 16
    $region25: #{gcn_forward.5} parent=1 // pred_fallthru
      _
    %p55 = scmp.eq.s32.totalorder 0, 0
    // Predicated region
    $region26: #{gcn_forward.5} parent=1 // pred_check
      %p56 = pneg %p55
    $region27: #{gcn_forward.5} parent=1 // pred_check_branch
      %58 = sbr.rel (%p56) target = $region29
    $region28: #{gcn_forward.5} parent=1 // pred_region
      %59 = vst [vmem:[#allocation2] sm:$0xff] 0.0
      %60 = vst [vmem:[#allocation2 + $0x8] sm:$0xff] 0.0
    $region29: #{gcn_forward.5} parent=1 // pred_fallthru
      _
    %v61 = vld [vmem:[#allocation2] sm:$0xff]
    %v62 = vld [vmem:[#allocation2 + $0x8] sm:$0xff]
    %v63 = vld [vmem:[#allocation3] sm:$0xf]
    %v64 = vld [vmem:[#allocation3 + $0x4] sm:$0xf]
    %v65 = vld [vmem:[#allocation6] sm:$0xf]
    %v66 = vld [vmem:[#allocation6 + $0x4] sm:$0xf]
    %v69 = vunpack.c.l.b16 %v63
    %v70 = vunpack.c.l.b16 %v64
    %v71 = vpack.c.b16 %v70, %v69
    %v74 = vunpack.c.l.b16 %v65
    %v75 = vunpack.c.l.b16 %v66
    %v76 = vpack.c.b16 %v75, %v74
    %vm78 = vcmask 130048
    %v80 = vsel %vm78, %v71, 0
    %82 = vmatprep.subr.bf16.mxu0 0
    %83 = vmatpush1.bf16.msra.mxu0 %v76
    %84 = vmatprep.subr.bf16.mxu0 0
    %85 = vmatpush1.bf16.msra.mxu0 0
    %86 = vmatprep.subr.bf16.mxu0 0
    %87 = vmatpush1.bf16.msra.mxu0 0
    %88 = vmatprep.subr.bf16.mxu0 0
    %89 = vmatpush1.bf16.msra.mxu0 0
    %90 = vmatprep.subr.bf16.mxu0 0
    %91 = vmatpush1.bf16.msra.mxu0 0
    %92 = vmatprep.subr.bf16.mxu0 0
    %93 = vmatpush1.bf16.msra.mxu0 0
    %94 = vmatprep.subr.bf16.mxu0 0
    %95 = vmatpush1.bf16.msra.mxu0 0
    %96 = vmatprep.subr.bf16.mxu0 0
    %97 = vmatpush1.bf16.msra.mxu0 0
    %98 = vmatprep.subr.bf16.mxu0 0
    %99 = vmatpush1.bf16.msra.mxu0 0
    %100 = vmatprep.subr.bf16.mxu0 0
    %101 = vmatpush1.bf16.msra.mxu0 0
    %102 = vmatprep.subr.bf16.mxu0 0
    %103 = vmatpush1.bf16.msra.mxu0 0
    %104 = vmatprep.subr.bf16.mxu0 0
    %105 = vmatpush1.bf16.msra.mxu0 0
    %106 = vmatprep.subr.bf16.mxu0 0
    %107 = vmatpush1.bf16.msra.mxu0 0
    %108 = vmatprep.subr.bf16.mxu0 0
    %109 = vmatpush1.bf16.msra.mxu0 0
    %110 = vmatprep.subr.bf16.mxu0 0
    %111 = vmatpush1.bf16.msra.mxu0 0
    %112 = vmatprep.subr.bf16.mxu0 0
    %113 = vmatpush1.bf16.msra.mxu0 0
    %114 = vmatprep.mubr.bf16.mxu0 0
    %115 = vmatmul.mubr.bf16.gmra.mrb[0].mxu0 %v80
    %v116 = vpop.f32.mrb[0].mxu0
    %v117 = vadd.f32 0.0, %v116
    %v118 = vpop.f32.mrb[0].mxu0
    %v119 = vpop.f32.mrb[0].mxu0
    %v120 = vadd.f32 0.0, %v119
    %v121 = vpop.f32.mrb[0].mxu0
    %122 = vdwg.mxu0
    %v123 = vadd.f32 %v61, %v117
    %v124 = vadd.f32 %v62, %v120
    %125 = vst [vmem:[#allocation2] sm:$0xff] %v123
    %126 = vst [vmem:[#allocation2 + $0x8] sm:$0xff] %v124
    // Predicated region
    $region30: #{gcn_forward.5} parent=1 // pred_check
      %p127 = pneg %p55
    $region31: #{gcn_forward.5} parent=1 // pred_check_branch
      %129 = sbr.rel (%p127) target = $region33
    $region32: #{gcn_forward.5} parent=1 // pred_region
      %v130 = vld [vmem:[#allocation2] sm:$0xff]
      %v131 = vld [vmem:[#allocation2 + $0x8] sm:$0xff]
      %v132 = vld [vmem:[#allocation8] sm:$0x1]
      %v134 = vlaneseq
      %v135 = vshrl.u32 %v134, 7
      %v136 = vsub.s32 0, %v135
      %v137 = vrot.slane %v132, %v136
      %v139 = vadd.f32 %v130, %v137
      %v140 = vadd.f32 %v131, %v137
      %v141 = vmax.f32 %v139, 0.0
      %v142 = vmax.f32 %v140, 0.0
      %v143 = vpack.c.bf16 %v142, %v141
      %v145 = vunpack.c.l.b16 %v143
      %v146 = vunpack.c.h.b16 %v143
      %v147 = vpack.c.b16 %v145, %v145
      %v148 = vpack.c.b16 %v146, %v146
      %151 = vst [vmem:[#allocation9] sm:$0xf] %v147
      %152 = vst [vmem:[#allocation9 + $0x4] sm:$0xf] %v148
    $region33: #{gcn_forward.5} parent=1 // pred_fallthru
      _
    // Predicated region
    $region34: #{gcn_forward.5} parent=1 // pred_check
      _
    $region35: #{gcn_forward.5} parent=1 // pred_check_branch
      %154 = sbr.rel (0) target = $region37
    $region36: #{gcn_forward.5} parent=1 // pred_region
      %s156 = ssub.s32 128, 128
      %157 = vsyncadd [#allocation5], %s156
      %s158 = sshll.u32 [#allocation9], 4
      %s159 = int_to_ptr.vmem [resolvable:$true] %s158
      %164 = dma.vmem_to_hbm [thread:$0]  %s159, 128, %s3, [#allocation5], 64, 64, 4
    $region37: #{gcn_forward.5} parent=1 // pred_fallthru
      _
    // Predicated region
    $region38: #{gcn_forward.5} parent=1 // pred_check
      _
    $region39: #{gcn_forward.5} parent=1 // pred_check_branch
      %166 = sbr.rel (0) target = $region41
    $region40: #{gcn_forward.5} parent=1 // pred_region
      %167 = dma.done [#allocation5], 128
    $region41: #{gcn_forward.5} parent=1 // pred_fallthru
      _
    %168 = vsyncpa [#allocation4], 1
    %169 = vsyncpa [#allocation7], 1
    %170 = vsyncpa [#allocation5], 1

</llo_original>
